<compile_context>
chip_gen: v5e
topology: v5e:2x2
jax: 0.10.0
libtpu: 0.0.40
codegen_flags: <defaults>
</compile_context>

<pallas_src>
import functools

import jax
import jax.numpy as jnp
from jax import lax
from jax.experimental import pallas as pl
from jax.experimental.pallas import tpu as pltpu

LEAKY_SLOPE = 0.01     # torch.nn.LeakyReLU default negative_slope
LN_EPS = 1e-5          # torch.nn.LayerNorm default eps
LANES = 128
MAX_TILE_B = 1024      # ~600 B/row of VMEM -> 1024 rows is well under budget


def dqn_kernel(x_ref, p_ref, out_ref, *, obs, num_actions, hidden):
    """x:[TB,obs]  p:[obs+A+5, Hp] packed params  out:[TB,A].

    Param-slab row layout (all rows zero-padded to Hp lanes):
      rows [0, obs)          : w1^T                (obs, Hp)
      row  obs               : b1
      row  obs+1             : gamma
      row  obs+2             : beta
      row  obs+3             : lane mask (1.0 on the first `hidden` lanes)
      rows [obs+4, obs+4+A)  : w2                  (A, Hp)  -- contracted trans_b
      row  obs+4+A           : b2 in the first A lanes
    """
    r_b1 = obs
    r_gamma = obs + 1
    r_beta = obs + 2
    r_mask = obs + 3
    r_w2 = obs + 4
    r_b2 = obs + 4 + num_actions

    # ---- Linear 1: [TB, obs] @ [obs, Hp] -> [TB, Hp] (MXU, f32 acc) ----
    h = jnp.dot(x_ref[...], p_ref[0:obs, :],
                preferred_element_type=jnp.float32)
    h = h + p_ref[r_b1:r_b1 + 1, :]          # b1; zero on padded lanes

    # ---- LayerNorm over the TRUE hidden width (padded lanes excluded) ----
    inv_h = 1.0 / hidden
    mean = jnp.sum(h, axis=-1, keepdims=True) * inv_h     # padded h lanes are 0
    centered = (h - mean) * p_ref[r_mask:r_mask + 1, :]   # mask row zeroes pads
    var = jnp.sum(centered * centered, axis=-1, keepdims=True) * inv_h
    inv_std = lax.rsqrt(var + LN_EPS)
    # gamma/beta are zero on padded lanes, so padded lanes end up exactly 0.
    h = (centered * inv_std * p_ref[r_gamma:r_gamma + 1, :]
         + p_ref[r_beta:r_beta + 1, :])

    # ---- LeakyReLU (single VPU max instead of cmp+select) ----
    h = jnp.maximum(h, LEAKY_SLOPE * h)

    # ---- Linear 2: [TB, Hp] x [A, Hp] (contract dim1 with dim1) -> [TB, A] ----
    out = lax.dot_general(h, p_ref[r_w2:r_w2 + num_actions, :],
                          dimension_numbers=(((1,), (1,)), ((), ())),
                          preferred_element_type=jnp.float32)
    out = out + p_ref[r_b2:r_b2 + 1, 0:num_actions]
    out_ref[...] = out.astype(out_ref.dtype)


def prepare_params(w1, b1, gamma, beta, w2, b2):
    """One-time preprocessing of torch-layout params (call once, reuse forever).

    Packs everything into a single [obs + num_actions + 5, H_pad] f32 slab so
    the kernel needs exactly two input DMAs (x tile + param slab).
    Returns (params_slab, hidden).
    """
    hidden, obs = w1.shape
    num_actions = w2.shape[0]
    h_pad = max(LANES, pl.cdiv(hidden, LANES) * LANES)

    rows = obs + num_actions + 5
    p = jnp.zeros((rows, h_pad), jnp.float32)
    p = p.at[0:obs, :hidden].set(w1.T.astype(jnp.float32))          # w1^T
    p = p.at[obs, :hidden].set(b1.astype(jnp.float32))              # b1
    p = p.at[obs + 1, :hidden].set(gamma.astype(jnp.float32))       # gamma
    p = p.at[obs + 2, :hidden].set(beta.astype(jnp.float32))        # beta
    p = p.at[obs + 3, :hidden].set(jnp.ones((hidden,), jnp.float32))  # lane mask
    p = p.at[obs + 4:obs + 4 + num_actions, :hidden].set(
        w2.astype(jnp.float32))                                     # w2 (A, H)
    p = p.at[obs + 4 + num_actions, :num_actions].set(
        b2.astype(jnp.float32))                                     # b2
    return p, hidden


def _pick_tile_b(batch):
    # Overhead-bound kernel: prefer ONE grid step (grid=(1,)) whenever the
    # batch fits; only split for very large batches, and then only into
    # multiple-of-8 tiles.  Per-row VMEM is ~600 B so 1024 rows is tiny.
    if batch <= MAX_TILE_B:
        return batch
    for cand in range(MAX_TILE_B, 7, -8):
        if batch % cand == 0:
            return cand
    return batch


@functools.partial(jax.jit, static_argnames=("hidden",))
def dqn_forward(x, params_slab, *, hidden):
    batch, obs = x.shape
    h_pad = params_slab.shape[1]
    num_actions = params_slab.shape[0] - obs - 5
    tile_b = _pick_tile_b(batch)
    grid = (batch // tile_b,)

    cost = pl.CostEstimate(
        flops=2 * batch * (obs * h_pad + h_pad * num_actions),
        transcendentals=batch,
        bytes_accessed=4 * (x.size + params_slab.size + batch * num_actions),
    )

    kernel = functools.partial(dqn_kernel, obs=obs,
                               num_actions=num_actions, hidden=hidden)

    return pl.pallas_call(
        kernel,
        out_shape=jax.ShapeDtypeStruct((batch, num_actions), x.dtype),
        grid_spec=pltpu.PrefetchScalarGridSpec(
            num_scalar_prefetch=0,
            grid=grid,
            in_specs=[
                pl.BlockSpec((tile_b, obs), lambda i: (i, 0)),   # x tile
                pl.BlockSpec((obs + num_actions + 5, h_pad),
                             lambda i: (0, 0)),                  # param slab (resident)
            ],
            out_specs=pl.BlockSpec((tile_b, num_actions), lambda i: (i, 0)),
        ),
        compiler_params=pltpu.CompilerParams(
            dimension_semantics=("parallel",)),
        cost_estimate=cost,
    )(x, params_slab)


def reference_forward(x, w1, b1, gamma, beta, w2, b2):
    h = x @ w1.T + b1
    mean = jnp.mean(h, axis=-1, keepdims=True)
    var = jnp.mean((h - mean) ** 2, axis=-1, keepdims=True)
    h = (h - mean) * lax.rsqrt(var + LN_EPS) * gamma + beta
    h = jnp.where(h >= 0, h, LEAKY_SLOPE * h)
    return h @ w2.T + b2


if __name__ == "__main__":
    batch = 8
    obs_size = 16
    hidden_size = 20
    num_actions = 4

    key = jax.random.PRNGKey(0)
    kx, kw1, kb1, kw2, kb2 = jax.random.split(key, 5)

    x = jax.random.normal(kx, (batch, obs_size), dtype=jnp.float32)

    # Deterministic, torch-Linear-like init (uniform in +/- 1/sqrt(fan_in)).
    lim1 = 1.0 / (obs_size ** 0.5)
    w1 = jax.random.uniform(kw1, (hidden_size, obs_size), jnp.float32, -lim1, lim1)
    b1 = jax.random.uniform(kb1, (hidden_size,), jnp.float32, -lim1, lim1)

    gamma = jnp.ones((hidden_size,), jnp.float32)   # LayerNorm affine init
    beta = jnp.zeros((hidden_size,), jnp.float32)

    lim2 = 1.0 / (hidden_size ** 0.5)
    w2 = jax.random.uniform(kw2, (num_actions, hidden_size), jnp.float32, -lim2, lim2)
    b2 = jax.random.uniform(kb2, (num_actions,), jnp.float32, -lim2, lim2)

    # One-time parameter preprocessing, hoisted out of the per-step hot path.
    params_slab, hidden = prepare_params(w1, b1, gamma, beta, w2, b2)

    out = dqn_forward(x, params_slab, hidden=hidden)
    jax.block_until_ready(out)

    ref = reference_forward(x, w1, b1, gamma, beta, w2, b2)
    assert out.shape == (batch, num_actions)
    assert jnp.allclose(out, ref, atol=2e-5, rtol=2e-5), float(
        jnp.max(jnp.abs(out - ref)))

    print("KERNEL_OK")
</pallas_src>

<mosaic_0001>
module attributes {stable_mosaic.version = 11 : i64} {
  func.func @dqn_kernel(%arg0: i32, %arg1: memref<8x16xf32, #tpu.memory_space<vmem>>, %arg2: memref<25x128xf32, #tpu.memory_space<vmem>>, %arg3: memref<8x4xf32, #tpu.memory_space<vmem>>) attributes {dimension_semantics = [#tpu.dimension_semantics<parallel>], iteration_bounds = array<i64: 1>, scalar_prefetch = 0 : i64, scratch_operands = 0 : i64, tpu.core_type = #tpu.core_type<tc>, window_params = [{transform_indices = @transform_0, window_bounds = array<i64: 8, 16>}, {pipeline_mode = #tpu.pipeline_mode<synchronous>, transform_indices = @transform_1, window_bounds = array<i64: 25, 128>}, {transform_indices = @transform_2, window_bounds = array<i64: 8, 4>}]} {
    %c0 = arith.constant 0 : index
    %c0_0 = arith.constant 0 : index
    %0 = vector.load %arg1[%c0, %c0_0] : memref<8x16xf32, #tpu.memory_space<vmem>>, vector<8x16xf32>
    %c0_1 = arith.constant 0 : index
    %c0_2 = arith.constant 0 : index
    %1 = vector.load %arg2[%c0_1, %c0_2] : memref<25x128xf32, #tpu.memory_space<vmem>>, vector<16x128xf32>
    %cst = arith.constant dense<0.000000e+00> : vector<8x128xf32>
    %2 = tpu.matmul %0, %1, %cst {dimension_numbers = #tpu.dot_dimension_numbers<[1], [0], [0], [1], [0, 0, 1, 1], [], []>} : vector<8x16xf32>, vector<16x128xf32>, vector<8x128xf32> -> vector<8x128xf32>
    %c16 = arith.constant 16 : index
    %c0_3 = arith.constant 0 : index
    %3 = vector.load %arg2[%c16, %c0_3] : memref<25x128xf32, #tpu.memory_space<vmem>>, vector<1x128xf32>
    %4 = vector.broadcast %3 : vector<1x128xf32> to vector<8x128xf32>
    %5 = arith.addf %2, %4 : vector<8x128xf32>
    %cst_4 = arith.constant dense<0.000000e+00> : vector<8xf32>
    %6 = vector.multi_reduction <add>, %5, %cst_4 [1] : vector<8x128xf32> to vector<8xf32>
    %7 = vector.shape_cast %6 : vector<8xf32> to vector<8x1xf32>
    %cst_5 = arith.constant 5.000000e-02 : f32
    %8 = vector.broadcast %cst_5 : f32 to vector<8x1xf32>
    %9 = arith.mulf %7, %8 : vector<8x1xf32>
    %10 = vector.broadcast %9 : vector<8x1xf32> to vector<8x128xf32>
    %11 = arith.subf %5, %10 : vector<8x128xf32>
    %c19 = arith.constant 19 : index
    %c0_6 = arith.constant 0 : index
    %12 = vector.load %arg2[%c19, %c0_6] : memref<25x128xf32, #tpu.memory_space<vmem>>, vector<1x128xf32>
    %13 = vector.broadcast %12 : vector<1x128xf32> to vector<8x128xf32>
    %14 = arith.mulf %11, %13 : vector<8x128xf32>
    %15 = arith.mulf %14, %14 : vector<8x128xf32>
    %cst_7 = arith.constant dense<0.000000e+00> : vector<8xf32>
    %16 = vector.multi_reduction <add>, %15, %cst_7 [1] : vector<8x128xf32> to vector<8xf32>
    %17 = vector.shape_cast %16 : vector<8xf32> to vector<8x1xf32>
    %cst_8 = arith.constant 5.000000e-02 : f32
    %18 = vector.broadcast %cst_8 : f32 to vector<8x1xf32>
    %19 = arith.mulf %17, %18 : vector<8x1xf32>
    %cst_9 = arith.constant 9.99999974E-6 : f32
    %20 = vector.broadcast %cst_9 : f32 to vector<8x1xf32>
    %21 = arith.addf %19, %20 : vector<8x1xf32>
    %22 = math.rsqrt %21 : vector<8x1xf32>
    %23 = vector.broadcast %22 : vector<8x1xf32> to vector<8x128xf32>
    %24 = arith.mulf %14, %23 : vector<8x128xf32>
    %c17 = arith.constant 17 : index
    %c0_10 = arith.constant 0 : index
    %25 = vector.load %arg2[%c17, %c0_10] : memref<25x128xf32, #tpu.memory_space<vmem>>, vector<1x128xf32>
    %26 = vector.broadcast %25 : vector<1x128xf32> to vector<8x128xf32>
    %27 = arith.mulf %24, %26 : vector<8x128xf32>
    %c18 = arith.constant 18 : index
    %c0_11 = arith.constant 0 : index
    %28 = vector.load %arg2[%c18, %c0_11] : memref<25x128xf32, #tpu.memory_space<vmem>>, vector<1x128xf32>
    %29 = vector.broadcast %28 : vector<1x128xf32> to vector<8x128xf32>
    %30 = arith.addf %27, %29 : vector<8x128xf32>
    %cst_12 = arith.constant 0.00999999977 : f32
    %31 = vector.broadcast %cst_12 : f32 to vector<8x128xf32>
    %32 = arith.mulf %31, %30 : vector<8x128xf32>
    %33 = arith.maximumf %30, %32 : vector<8x128xf32>
    %c20 = arith.constant 20 : index
    %c0_13 = arith.constant 0 : index
    %34 = vector.load %arg2[%c20, %c0_13] : memref<25x128xf32, #tpu.memory_space<vmem>>, vector<4x128xf32>
    %cst_14 = arith.constant dense<0.000000e+00> : vector<8x4xf32>
    %35 = tpu.matmul %33, %34, %cst_14 {dimension_numbers = #tpu.dot_dimension_numbers<[1], [1], [0], [0], [0, 0, 1, 0], [], []>} : vector<8x128xf32>, vector<4x128xf32>, vector<8x4xf32> -> vector<8x4xf32>
    %c24 = arith.constant 24 : index
    %c0_15 = arith.constant 0 : index
    %36 = vector.load %arg2[%c24, %c0_15] : memref<25x128xf32, #tpu.memory_space<vmem>>, vector<1x4xf32>
    %37 = vector.broadcast %36 : vector<1x4xf32> to vector<8x4xf32>
    %38 = arith.addf %35, %37 : vector<8x4xf32>
    %c0_16 = arith.constant 0 : index
    %c0_17 = arith.constant 0 : index
    %39 = vector.load %arg3[%c0_16, %c0_17] : memref<8x4xf32, #tpu.memory_space<vmem>>, vector<8x4xf32>
    tpu.vector_store %arg3[%c0_16, %c0_17], %38 {strides = array<i32>} : memref<8x4xf32, #tpu.memory_space<vmem>>, vector<8x4xf32>,
    return
  }
  func.func @transform_0(%arg0: i32) -> (i32, i32) {
    %c0_i32 = arith.constant 0 : i32
    %c0_i32_0 = arith.constant 0 : i32
    return %arg0, %c0_i32 : i32, i32
  }
  func.func @transform_1(%arg0: i32) -> (i32, i32) {
    %c0_i32 = arith.constant 0 : i32
    %c0_i32_0 = arith.constant 0 : i32
    %c0_i32_1 = arith.constant 0 : i32
    return %c0_i32, %c0_i32_0 : i32, i32
  }
  func.func @transform_2(%arg0: i32) -> (i32, i32) {
    %c0_i32 = arith.constant 0 : i32
    %c0_i32_0 = arith.constant 0 : i32
    return %arg0, %c0_i32 : i32, i32
  }
}

</mosaic_0001>

<llo_original>
// kernel: dqn_forward.1
$region0: #{dqn_forward.1}
  #allocation0 [shape = 'u32[]', space=smem, size = 0x4, offset = 0x4, fixed_abs, tag = 'smem constant byte address 0x4 - core index']
  #allocation1 [shape = 'u32[72,128]{1,0:T(1,128)}', space=vmem, size = 0x9000, scoped, tag = 'internal scratch']
  %s0 = inlined_call_operand.hbm [shape: f32[8,16], index: 0, kind: input, shape index: {}]
  %s1 = inlined_call_operand.hbm [shape: f32[25,128], index: 1, kind: input, shape index: {}]
  %s2 = inlined_call_operand.vmem [shape: f32[8,4], index: 2, kind: output, shape index: {}]
  %s3 = sld [smem:[#allocation0]]
  $region26: #{dqn_forward.1} parent=0
    _
  %s5 = ssub.s32 1, %s3
  %s6 = scalar_select 0, %s5, %s3
  $region1: #{dqn_forward.1} parent=0
    #allocation2 [shape = 'u8[4096]{0}', space=vmem, size = 0x1000, scoped, tag = 'input window, operand 0, single buffered']
    #allocation3 [shape = 's32[1]{0}', space=sflag, size = 0x4, scoped, tag = 'scoped memory for dqn_forward.1']
    #allocation4 [shape = 'u8[16384]{0}', space=vmem, size = 0x4000, scoped, tag = 'input window, operand 1, single buffered']
    #allocation5 [shape = 's32[1]{0}', space=sflag, size = 0x4, scoped, tag = 'scoped memory for dqn_forward.1']
    %7 = vsyncpa [#allocation3], 0
    %8 = vsyncpa [#allocation5], 0
    // Predicated region
    $region2: #{dqn_forward.1} parent=1 // pred_check
      _
    $region3: #{dqn_forward.1} parent=1 // pred_check_branch
      %10 = sbr.rel (0) target = $region5
    $region4: #{dqn_forward.1} parent=1 // pred_region
      %12 = vsyncadd [#allocation3], 0
      %s14 = sshll.u32 %s0, 4
      %s15 = int_to_ptr.hbm [resolvable:$true] %s14
      %s16 = sshll.u32 [#allocation2], 4
      %s17 = int_to_ptr.vmem [resolvable:$true] %s16
      %19 = dma.hbm_to_vmem [thread:$0]  %s15, 128, %s17, [#allocation3]
    $region5: #{dqn_forward.1} parent=1 // pred_fallthru
      _
    // Predicated region
    $region6: #{dqn_forward.1} parent=1 // pred_check
      _
    $region7: #{dqn_forward.1} parent=1 // pred_check_branch
      %21 = sbr.rel (0) target = $region9
    $region8: #{dqn_forward.1} parent=1 // pred_region
      %23 = vsyncadd [#allocation5], 0
      %s24 = sshll.u32 %s1, 4
      %s25 = int_to_ptr.hbm [resolvable:$true] %s24
      %s26 = sshll.u32 [#allocation4], 4
      %s27 = int_to_ptr.vmem [resolvable:$true] %s26
      %32 = dma.hbm_to_vmem [thread:$0]  %s25, 512, %s27, [#allocation5], 128, 128, 8
    $region9: #{dqn_forward.1} parent=1 // pred_fallthru
      _
    // Predicated region
    $region10: #{dqn_forward.1} parent=1 // pred_check
      _
    $region11: #{dqn_forward.1} parent=1 // pred_check_branch
      %34 = sbr.rel (0) target = $region13
    $region12: #{dqn_forward.1} parent=1 // pred_region
      %36 = dma.done [#allocation3], 128
    $region13: #{dqn_forward.1} parent=1 // pred_fallthru
      _
    // Predicated region
    $region14: #{dqn_forward.1} parent=1 // pred_check
      _
    $region15: #{dqn_forward.1} parent=1 // pred_check_branch
      %38 = sbr.rel (0) target = $region17
    $region16: #{dqn_forward.1} parent=1 // pred_region
      %40 = dma.done [#allocation5], 512
    $region17: #{dqn_forward.1} parent=1 // pred_fallthru
      _
    %v41 = vld [vmem:[#allocation2] sm:$0xff]
    %v42 = vld [vmem:[#allocation4] sm:$0xff]
    %v43 = vld [vmem:[#allocation4 + $0x8] sm:$0xff]
    %v44 = vld [vmem:[#allocation4 + $0x10] sm:$0x1]
    %v45 = vperm.slane %v44, 0
    %vm46 = vcmask 130048
    %v48 = vsel %vm46, %v41, 0
    %50 = vmatpush.msra.mxu0 0.0
    %51 = vmatpush.msra.mxu0 0.0
    %52 = vmatpush.msra.mxu0 0.0
    %53 = vmatpush.msra.mxu0 0.0
    %54 = vmatpush.msra.mxu0 0.0
    %55 = vmatpush.msra.mxu0 0.0
    %56 = vmatpush.msra.mxu0 0.0
    %57 = vmatpush.msra.mxu0 0.0
    %58 = vmatpush.msra.mxu0 0.0
    %59 = vmatpush.msra.mxu0 0.0
    %60 = vmatpush.msra.mxu0 0.0
    %61 = vmatpush.msra.mxu0 0.0
    %62 = vmatpush.msra.mxu0 0.0
    %63 = vmatpush.msra.mxu0 0.0
    %64 = vmatpush.msra.mxu0 %v43
    %65 = vmatpush.msra.mxu0 %v42
    %66 = vmatmul.f32.gmra.mxu0 %v48
    %v67 = vpop.f32.mrf.mxu0
    %v68 = vadd.f32 %v45, %v67
    %69 = vdwg.mxu0
    %70 = vadd.xlane.f32.xlu0 %v68
    %v71 = vpop.xlane.xlu0 %70
    %v72 = vmul.f32 %v71, 0.05
    %v73 = vsub.f32 %v68, %v72
    %v74 = vld [vmem:[#allocation4 + $0x13] sm:$0x1]
    %v75 = vperm.slane %v74, 0
    %v76 = vmul.f32 %v73, %v75
    %v77 = vmul.f32 %v76, %v76
    %78 = vadd.xlane.f32.xlu0 %v77
    %v79 = vpop.xlane.xlu0 %78
    %v80 = vmul.f32 %v79, 0.05
    %v81 = vadd.f32 %v80, 1e-05
    %v82 = vrsqrt.pop %v81
    %v83 = vmul.f32 %v82, %v81
    %v84 = vmul.f32 %v83, %v82
    %v85 = vmul.f32 0.5, %v84
    %v86 = vsub.f32 1.5, %v85
    %v87 = vmul.f32 %v82, %v86
    %vm88 = vweird.f32 %v81
    %vm89 = vweird.f32 %v82
    %vm90 = vmor %vm88, %vm89
    %v91 = vsel %vm90, %v82, %v87
    %v92 = vmul.f32 %v76, %v91
    %v93 = vld [vmem:[#allocation4 + $0x11] sm:$0x1]
    %v94 = vperm.slane %v93, 0
    %v95 = vmul.f32 %v92, %v94
    %v96 = vld [vmem:[#allocation4 + $0x12] sm:$0x1]
    %v97 = vperm.slane %v96, 0
    %v98 = vadd.f32 %v95, %v97
    %v99 = vmul.f32 %v98, 0.01
    %v100 = vmax.f32 %v98, %v99
    %v101 = vld [vmem:[#allocation4 + $0x14] sm:$0xf]
    %v102 = vld [vmem:[#allocation4 + $0x18] sm:$0x1]
    %v103 = vperm.slane %v102, 0
    %104 = vmatpush.xpose.msra.mxu0 0.0
    %105 = vmatpush.xpose.msra.mxu0 0.0
    %106 = vmatpush.xpose.msra.mxu0 0.0
    %107 = vmatpush.xpose.msra.mxu0 0.0
    %108 = vmatpush.xpose.msra.mxu0 0.0
    %109 = vmatpush.xpose.msra.mxu0 0.0
    %110 = vmatpush.xpose.msra.mxu0 0.0
    %111 = vmatpush.xpose.msra.mxu0 0.0
    %112 = vmatpush.xpose.msra.mxu0 0.0
    %113 = vmatpush.xpose.msra.mxu0 0.0
    %114 = vmatpush.xpose.msra.mxu0 0.0
    %115 = vmatpush.xpose.msra.mxu0 0.0
    %116 = vmatpush.xpose.msra.mxu0 0.0
    %117 = vmatpush.xpose.msra.mxu0 0.0
    %118 = vmatpush.xpose.msra.mxu0 0.0
    %119 = vmatpush.xpose.msra.mxu0 %v101
    %120 = vmatmul.f32.gmra.mxu0 %v100
    %v121 = vpop.f32.mrf.mxu0
    %v122 = vadd.f32 %v103, %v121
    %123 = vdwg.mxu0
    %vm124 = vcmask 31744
    %125 = vst.msk [vmem:[%s2] sm:$0xff] %vm124, %v122
    // Predicated region
    $region18: #{dqn_forward.1} parent=1 // pred_check
      _
    $region19: #{dqn_forward.1} parent=1 // pred_check_branch
      %127 = sbr.rel (0) target = $region21
    $region20: #{dqn_forward.1} parent=1 // pred_region
      _
    $region21: #{dqn_forward.1} parent=1 // pred_fallthru
      _
    // Predicated region
    $region22: #{dqn_forward.1} parent=1 // pred_check
      _
    $region23: #{dqn_forward.1} parent=1 // pred_check_branch
      %129 = sbr.rel (0) target = $region25
    $region24: #{dqn_forward.1} parent=1 // pred_region
      _
    $region25: #{dqn_forward.1} parent=1 // pred_fallthru
      _
    %130 = vsyncpa [#allocation3], 1
    %131 = vsyncpa [#allocation5], 1

</llo_original>
